<compile_context>
chip_gen: v5e
topology: v5e:2x2
jax: 0.10.0
libtpu: 0.0.40
codegen_flags: <defaults>
</compile_context>

<pallas_src>
import functools

import jax
import jax.numpy as jnp
from jax.experimental import pallas as pl
from jax.experimental.pallas import tpu as pltpu


def _round_up(x, m):
    return ((x + m - 1) // m) * m


def _vmem_capacity_bytes():
    """Generation-aware VMEM capacity (64 MiB/TC on v7x, 128 MiB on v5e/v6e)."""
    try:
        info = pltpu.get_tpu_info()
        for attr in ("vmem_capacity_bytes", "vmem_bytes", "vmem_size_bytes"):
            v = getattr(info, attr, None)
            if v:
                return int(v)
    except Exception:
        pass
    return 64 << 20  # conservative default (v7x per-TensorCore)


def _score_topk_kernel(q_ref, k_ref, val_ref, idx_ref, *, topk, n_valid, needs_mask):
    """Score one (tile_m, tile_n) tile on the MXU and merge it into a running
    per-row top-k held in the VMEM-resident output blocks.

    q_ref  : (tile_m, Kd)     bf16
    k_ref  : (Kd, tile_n)     bf16   (keys pre-transposed, lane-dense in N)
    val_ref: (tile_m, topk)   f32    accumulator, resident across the N axis
    idx_ref: (tile_m, topk)   int32  accumulator, resident across the N axis
    """
    j = pl.program_id(1)

    @pl.when(j == 0)
    def _():
        val_ref[...] = jnp.full(val_ref.shape, -jnp.inf, dtype=val_ref.dtype)
        idx_ref[...] = jnp.zeros(idx_ref.shape, dtype=idx_ref.dtype)

    # MXU: (tile_m, Kd) @ (Kd, tile_n) with f32 accumulation.
    scores = jax.lax.dot_general(
        q_ref[...], k_ref[...],
        dimension_numbers=(((1,), (0,)), ((), ())),
        preferred_element_type=jnp.float32,
    )
    tm, tn = scores.shape

    # Global key indices of this tile's columns; mask out N-padding columns.
    col = j * tn + jax.lax.broadcasted_iota(jnp.int32, (tm, tn), 1)
    neg_inf = jnp.float32(-jnp.inf)
    if needs_mask:
        scores = jnp.where(col < n_valid, scores, neg_inf)

    vals = val_ref[...]
    idxs = idx_ref[...]
    slot = jax.lax.broadcasted_iota(jnp.int32, vals.shape, 1)
    big = jnp.int32(2 ** 30)

    # Merge the tile into the running top-k (unsorted set; sorted in wrapper).
    # Each iteration: take the row max of the tile, replace the current row
    # minimum of the accumulator if the max is larger, clear the taken element.
    # Clearing unconditionally is safe: the running min never decreases, so an
    # element not inserted now can never be inserted later.
    for _ in range(topk):
        cur_max = jnp.max(scores, axis=-1, keepdims=True)                  # (tm,1)
        cand = jnp.where(scores == cur_max, col, big)                      # (tm,tn)
        cur_arg = jnp.min(cand, axis=-1, keepdims=True)                    # (tm,1)
        run_min = jnp.min(vals, axis=-1, keepdims=True)                    # (tm,1)
        min_slot = jnp.min(jnp.where(vals == run_min, slot, big),
                           axis=-1, keepdims=True)                         # (tm,1)
        replace = cur_max > run_min                                        # (tm,1)
        write = (slot == min_slot) & replace                               # (tm,topk)
        vals = jnp.where(write, cur_max, vals)
        idxs = jnp.where(write, cur_arg, idxs)
        scores = jnp.where(cand == cur_arg, neg_inf, scores)               # clear taken

    val_ref[...] = vals
    idx_ref[...] = idxs


def prepare_peer_keys(keys, compute_dtype=jnp.bfloat16):
    """One-time (init-time) layout prep: (num_keys, dim_key) -> (dim_key, num_keys)
    in bf16, so no per-call transpose/cast pass over the key parameter."""
    return jnp.asarray(keys).T.astype(compute_dtype)


def peer_score_topk(query, keys_t, *, topk, tile_m=None, tile_n=None,
                    compute_dtype=jnp.bfloat16):
    """Fused PEER product-key scoring + per-axis top-k.

    query : (B, dim)              viewed as (B, 2, dim//2) product-key halves
    keys_t: (dim//2, num_keys)    pre-transposed bf16 key table (prepare_peer_keys)
    Returns (scores, indices), each (B, 2, topk) with scores sorted descending,
    i.e. the (scores_x, scores_y) / (indices_x, indices_y) pair of the module.
    """
    B, dim = query.shape
    Kd, N = keys_t.shape
    assert dim == 2 * Kd, "dim must equal 2 * dim_key"
    assert 0 < topk <= N, "product_key_topk must be in (0, num_keys]"
    topk = int(topk)

    M = B * 2
    q2 = query.reshape(M, Kd).astype(compute_dtype)

    # ---------------- tile selection -------------------------------------
    if tile_n is None:
        n128 = _round_up(N, 128)
        # Keep the whole key panel resident along N when it is small.
        tile_n = n128 if (Kd * n128 * 2 <= (2 << 20) and n128 <= 2048) else 512
    tile_n = max(128, _round_up(int(tile_n), 128))

    if tile_m is None:
        # Bound the f32 score tile (tile_m x tile_n) to ~4 MiB of VMEM.
        cap_m = max(16, ((4 << 20) // (4 * tile_n)) // 16 * 16)
        tile_m = min(_round_up(M, 16), 1024, cap_m)
    tile_m = max(16, _round_up(int(tile_m), 16))   # bf16 packs 2 rows / sublane

    # v7x dual TensorCore: keep >= 2 cells along the parallel M axis if possible.
    if M >= 32 and _round_up(M, tile_m) // tile_m < 2:
        tile_m = max(16, _round_up(pl.cdiv(M, 2), 16))

    M_pad = _round_up(M, tile_m)
    N_pad = _round_up(N, tile_n)
    if M_pad != M:
        q2 = jnp.pad(q2, ((0, M_pad - M), (0, 0)))
    keys_in = keys_t
    if N_pad != N:
        # Padded key columns are masked to -inf inside the kernel.
        keys_in = jnp.pad(keys_t, ((0, 0), (0, N_pad - N)))

    grid = (M_pad // tile_m, N_pad // tile_n)

    # ---------------- VMEM budget / cost estimate ------------------------
    comp_bytes = jnp.dtype(compute_dtype).itemsize
    vmem_need = (2 * tile_m * Kd * comp_bytes          # q tile (double buffered)
                 + 2 * Kd * tile_n * comp_bytes        # keys tile (double buffered)
                 + 3 * tile_m * tile_n * 4             # f32 score tile + temps
                 + 4 * tile_m * topk * 4)              # val/idx accumulators
    vmem_cap = _vmem_capacity_bytes()
    vmem_limit = min(max(vmem_need + (8 << 20), 32 << 20), vmem_cap - (16 << 20))
    vmem_limit = int(max(vmem_limit, vmem_need + (4 << 20)))  # never below need

    cost = pl.CostEstimate(
        flops=2 * M_pad * N_pad * Kd,
        transcendentals=0,
        bytes_accessed=(M_pad * Kd * comp_bytes
                        + (M_pad // tile_m) * Kd * N_pad * comp_bytes
                        + 2 * M_pad * topk * 4),
    )

    kernel = functools.partial(_score_topk_kernel, topk=topk, n_valid=int(N),
                               needs_mask=bool(N_pad != N))

    vals, idxs = pl.pallas_call(
        kernel,
        out_shape=(jax.ShapeDtypeStruct((M_pad, topk), jnp.float32),
                   jax.ShapeDtypeStruct((M_pad, topk), jnp.int32)),
        grid=grid,
        in_specs=[
            pl.BlockSpec((tile_m, Kd), lambda i, j: (i, 0)),
            pl.BlockSpec((Kd, tile_n), lambda i, j: (0, j)),
        ],
        out_specs=(
            pl.BlockSpec((tile_m, topk), lambda i, j: (i, 0)),
            pl.BlockSpec((tile_m, topk), lambda i, j: (i, 0)),
        ),
        compiler_params=pltpu.CompilerParams(
            dimension_semantics=("parallel", "arbitrary"),
            vmem_limit_bytes=vmem_limit,
        ),
        cost_estimate=cost,
    )(q2, keys_in)

    vals = vals[:M]
    idxs = idxs[:M]
    # The kernel returns the top-k set unsorted; sort descending (tiny (M,k) op)
    # to match torch.topk semantics.
    svals, order = jax.lax.top_k(vals, topk)
    sidxs = jnp.take_along_axis(idxs, order, axis=-1)
    return svals.reshape(B, 2, topk), sidxs.reshape(B, 2, topk)


def _check(query, keys, topk, out_vals, out_idx, atol=2e-2, rtol=2e-2):
    """Plain-JAX reference: same bf16-input / f32-accumulation math."""
    B, dim = query.shape
    half = dim // 2
    q = query.reshape(B, 2, half).astype(jnp.bfloat16).astype(jnp.float32)
    k = keys.astype(jnp.bfloat16).astype(jnp.float32)
    sim = jnp.einsum('bpd,nd->bpn', q, k)
    ref_vals, _ = jax.lax.top_k(sim, topk)
    assert jnp.allclose(out_vals, ref_vals, atol=atol, rtol=rtol), "top-k values mismatch"
    gathered = jnp.take_along_axis(sim, out_idx, axis=-1)
    assert jnp.allclose(gathered, out_vals, atol=atol, rtol=rtol), "top-k indices mismatch"


if __name__ == "__main__":
    root = jax.random.PRNGKey(0)
    k1, k2, k3, k4 = jax.random.split(root, 4)

    # --- Test 1: small shapes consistent with the module -------------------
    # dim=32 (dim_key=16), num_keys=16 (num_experts=256), 2 rows, topk=8.
    dim, num_keys, rows, topk = 32, 16, 2, 8
    keys_param = jax.random.normal(k1, (num_keys, dim // 2), jnp.float32)
    query = jax.random.normal(k2, (rows, dim), jnp.float32)
    keys_t = prepare_peer_keys(keys_param)

    vals, idxs = peer_score_topk(query, keys_t, topk=topk)
    vals, idxs = jax.block_until_ready((vals, idxs))
    assert vals.shape == (rows, 2, topk) and idxs.shape == (rows, 2, topk)
    _check(query, keys_param, topk, vals, idxs)

    # --- Test 2: multi-cell grid: running top-k across several N tiles,
    #             N padding + in-kernel masking, multi-cell parallel M axis --
    dim2, num_keys2, rows2, topk2 = 128, 320, 48, 16
    keys2 = jax.random.normal(k3, (num_keys2, dim2 // 2), jnp.float32)
    query2 = jax.random.normal(k4, (rows2, dim2), jnp.float32)
    keys2_t = prepare_peer_keys(keys2)

    vals2, idxs2 = peer_score_topk(query2, keys2_t, topk=topk2,
                                   tile_m=32, tile_n=128)
    vals2, idxs2 = jax.block_until_ready((vals2, idxs2))
    assert vals2.shape == (rows2, 2, topk2) and idxs2.shape == (rows2, 2, topk2)
    _check(query2, keys2, topk2, vals2, idxs2)

    # TODO(synk): the rest of PEERLanguageModel (attention, layernorms, the
    # cartesian score combination + second top-k, expert-embedding gathers,
    # gelu/softmax expert mixing, lm_head) is not implemented as Pallas
    # kernels here; only the PEER product-key scoring + per-axis top-k (the
    # HBM/MXU hot path) is.
    print("KERNEL_OK")
</pallas_src>

<mosaic_0001>
module attributes {stable_mosaic.version = 11 : i64} {
  func.func @_score_topk_kernel(%arg0: i32, %arg1: i32, %arg2: memref<16x16xbf16, #tpu.memory_space<vmem>>, %arg3: memref<16x128xbf16, #tpu.memory_space<vmem>>, %arg4: memref<16x8xf32, #tpu.memory_space<vmem>>, %arg5: memref<16x8xi32, #tpu.memory_space<vmem>>) attributes {dimension_semantics = [#tpu.dimension_semantics<parallel>, #tpu.dimension_semantics<arbitrary>], iteration_bounds = array<i64: 1, 1>, scalar_prefetch = 0 : i64, scratch_operands = 0 : i64, tpu.core_type = #tpu.core_type<tc>, window_params = [{transform_indices = @transform_0, window_bounds = array<i64: 16, 16>}, {transform_indices = @transform_1, window_bounds = array<i64: 16, 128>}, {transform_indices = @transform_2, window_bounds = array<i64: 16, 8>}, {transform_indices = @transform_3, window_bounds = array<i64: 16, 8>}]} {
    %c0_i32 = arith.constant 0 : i32
    %0 = arith.cmpi eq, %arg1, %c0_i32 : i32
    %1 = arith.extui %0 : i1 to i32
    %c0_i32_0 = arith.constant 0 : i32
    %2 = arith.cmpi ne, %1, %c0_i32_0 : i32
    scf.if %2 {
      %cst_67 = arith.constant 0xFF800000 : f32
      %263 = vector.broadcast %cst_67 : f32 to vector<16x8xf32>
      %c0_68 = arith.constant 0 : index
      %c0_69 = arith.constant 0 : index
      %264 = vector.load %arg4[%c0_68, %c0_69] : memref<16x8xf32, #tpu.memory_space<vmem>>, vector<16x8xf32>
      tpu.vector_store %arg4[%c0_68, %c0_69], %263 {strides = array<i32>} : memref<16x8xf32, #tpu.memory_space<vmem>>, vector<16x8xf32>,
      %c0_i32_70 = arith.constant 0 : i32
      %265 = vector.broadcast %c0_i32_70 : i32 to vector<16x8xi32>
      %c0_71 = arith.constant 0 : index
      %c0_72 = arith.constant 0 : index
      %266 = vector.load %arg5[%c0_71, %c0_72] : memref<16x8xi32, #tpu.memory_space<vmem>>, vector<16x8xi32>
      tpu.vector_store %arg5[%c0_71, %c0_72], %265 {strides = array<i32>} : memref<16x8xi32, #tpu.memory_space<vmem>>, vector<16x8xi32>,
    } else {
    }
    %c0 = arith.constant 0 : index
    %c0_1 = arith.constant 0 : index
    %3 = vector.load %arg2[%c0, %c0_1] : memref<16x16xbf16, #tpu.memory_space<vmem>>, vector<16x16xbf16>
    %c0_2 = arith.constant 0 : index
    %c0_3 = arith.constant 0 : index
    %4 = vector.load %arg3[%c0_2, %c0_3] : memref<16x128xbf16, #tpu.memory_space<vmem>>, vector<16x128xbf16>
    %cst = arith.constant dense<0.000000e+00> : vector<16x128xf32>
    %5 = tpu.matmul %3, %4, %cst {dimension_numbers = #tpu.dot_dimension_numbers<[1], [0], [0], [1], [0, 0, 1, 1], [], []>} : vector<16x16xbf16>, vector<16x128xbf16>, vector<16x128xf32> -> vector<16x128xf32>
    %c128_i32 = arith.constant 128 : i32
    %6 = arith.muli %arg1, %c128_i32 : i32
    %7 = tpu.iota {dimensions = array<i32: 1>} : vector<16x128xi32>
    %8 = vector.broadcast %6 : i32 to vector<16x128xi32>
    %9 = arith.addi %8, %7 : vector<16x128xi32>
    %c16_i32 = arith.constant 16 : i32
    %10 = vector.broadcast %c16_i32 : i32 to vector<16x128xi32>
    %11 = arith.cmpi slt, %9, %10 : vector<16x128xi32>
    %cst_4 = arith.constant 0xFF800000 : f32
    %12 = vector.broadcast %cst_4 : f32 to vector<16x128xf32>
    %13 = arith.select %11, %5, %12 : vector<16x128xi1>, vector<16x128xf32>
    %c0_5 = arith.constant 0 : index
    %c0_6 = arith.constant 0 : index
    %14 = vector.load %arg4[%c0_5, %c0_6] : memref<16x8xf32, #tpu.memory_space<vmem>>, vector<16x8xf32>
    %c0_7 = arith.constant 0 : index
    %c0_8 = arith.constant 0 : index
    %15 = vector.load %arg5[%c0_7, %c0_8] : memref<16x8xi32, #tpu.memory_space<vmem>>, vector<16x8xi32>
    %16 = tpu.iota {dimensions = array<i32: 1>} : vector<16x8xi32>
    %cst_9 = arith.constant dense<0xFF800000> : vector<16xf32>
    %17 = vector.multi_reduction <maximumf>, %13, %cst_9 [1] : vector<16x128xf32> to vector<16xf32>
    %18 = vector.shape_cast %17 : vector<16xf32> to vector<16x1xf32>
    %19 = vector.broadcast %18 : vector<16x1xf32> to vector<16x128xf32>
    %20 = arith.cmpf oeq, %13, %19 : vector<16x128xf32>
    %c1073741824_i32 = arith.constant 1073741824 : i32
    %21 = vector.broadcast %c1073741824_i32 : i32 to vector<16x128xi32>
    %22 = arith.select %20, %9, %21 : vector<16x128xi1>, vector<16x128xi32>
    %cst_10 = arith.constant dense<2147483647> : vector<16xi32>
    %23 = vector.multi_reduction <minsi>, %22, %cst_10 [1] : vector<16x128xi32> to vector<16xi32>
    %24 = vector.shape_cast %23 : vector<16xi32> to vector<16x1xi32>
    %cst_11 = arith.constant dense<0x7F800000> : vector<16xf32>
    %25 = vector.multi_reduction <minimumf>, %14, %cst_11 [1] : vector<16x8xf32> to vector<16xf32>
    %26 = vector.shape_cast %25 : vector<16xf32> to vector<16x1xf32>
    %27 = vector.broadcast %26 : vector<16x1xf32> to vector<16x8xf32>
    %28 = arith.cmpf oeq, %14, %27 : vector<16x8xf32>
    %c1073741824_i32_12 = arith.constant 1073741824 : i32
    %29 = vector.broadcast %c1073741824_i32_12 : i32 to vector<16x8xi32>
    %30 = arith.select %28, %16, %29 : vector<16x8xi1>, vector<16x8xi32>
    %cst_13 = arith.constant dense<2147483647> : vector<16xi32>
    %31 = vector.multi_reduction <minsi>, %30, %cst_13 [1] : vector<16x8xi32> to vector<16xi32>
    %32 = vector.shape_cast %31 : vector<16xi32> to vector<16x1xi32>
    %33 = arith.cmpf ogt, %18, %26 : vector<16x1xf32>
    %34 = vector.broadcast %32 : vector<16x1xi32> to vector<16x8xi32>
    %35 = arith.cmpi eq, %16, %34 : vector<16x8xi32>
    %36 = vector.broadcast %33 : vector<16x1xi1> to vector<16x8xi1>
    %37 = arith.andi %35, %36 : vector<16x8xi1>
    %38 = vector.shape_cast %18 : vector<16x1xf32> to vector<16x1xf32>
    %39 = vector.broadcast %38 : vector<16x1xf32> to vector<16x8xf32>
    %40 = arith.select %37, %39, %14 : vector<16x8xi1>, vector<16x8xf32>
    %41 = vector.shape_cast %24 : vector<16x1xi32> to vector<16x1xi32>
    %42 = vector.broadcast %41 : vector<16x1xi32> to vector<16x8xi32>
    %43 = arith.select %37, %42, %15 : vector<16x8xi1>, vector<16x8xi32>
    %44 = vector.broadcast %24 : vector<16x1xi32> to vector<16x128xi32>
    %45 = arith.cmpi eq, %22, %44 : vector<16x128xi32>
    %cst_14 = arith.constant 0xFF800000 : f32
    %46 = vector.broadcast %cst_14 : f32 to vector<16x128xf32>
    %47 = arith.select %45, %46, %13 : vector<16x128xi1>, vector<16x128xf32>
    %cst_15 = arith.constant dense<0xFF800000> : vector<16xf32>
    %48 = vector.multi_reduction <maximumf>, %47, %cst_15 [1] : vector<16x128xf32> to vector<16xf32>
    %49 = vector.shape_cast %48 : vector<16xf32> to vector<16x1xf32>
    %50 = vector.broadcast %49 : vector<16x1xf32> to vector<16x128xf32>
    %51 = arith.cmpf oeq, %47, %50 : vector<16x128xf32>
    %c1073741824_i32_16 = arith.constant 1073741824 : i32
    %52 = vector.broadcast %c1073741824_i32_16 : i32 to vector<16x128xi32>
    %53 = arith.select %51, %9, %52 : vector<16x128xi1>, vector<16x128xi32>
    %cst_17 = arith.constant dense<2147483647> : vector<16xi32>
    %54 = vector.multi_reduction <minsi>, %53, %cst_17 [1] : vector<16x128xi32> to vector<16xi32>
    %55 = vector.shape_cast %54 : vector<16xi32> to vector<16x1xi32>
    %cst_18 = arith.constant dense<0x7F800000> : vector<16xf32>
    %56 = vector.multi_reduction <minimumf>, %40, %cst_18 [1] : vector<16x8xf32> to vector<16xf32>
    %57 = vector.shape_cast %56 : vector<16xf32> to vector<16x1xf32>
    %58 = vector.broadcast %57 : vector<16x1xf32> to vector<16x8xf32>
    %59 = arith.cmpf oeq, %40, %58 : vector<16x8xf32>
    %c1073741824_i32_19 = arith.constant 1073741824 : i32
    %60 = vector.broadcast %c1073741824_i32_19 : i32 to vector<16x8xi32>
    %61 = arith.select %59, %16, %60 : vector<16x8xi1>, vector<16x8xi32>
    %cst_20 = arith.constant dense<2147483647> : vector<16xi32>
    %62 = vector.multi_reduction <minsi>, %61, %cst_20 [1] : vector<16x8xi32> to vector<16xi32>
    %63 = vector.shape_cast %62 : vector<16xi32> to vector<16x1xi32>
    %64 = arith.cmpf ogt, %49, %57 : vector<16x1xf32>
    %65 = vector.broadcast %63 : vector<16x1xi32> to vector<16x8xi32>
    %66 = arith.cmpi eq, %16, %65 : vector<16x8xi32>
    %67 = vector.broadcast %64 : vector<16x1xi1> to vector<16x8xi1>
    %68 = arith.andi %66, %67 : vector<16x8xi1>
    %69 = vector.shape_cast %49 : vector<16x1xf32> to vector<16x1xf32>
    %70 = vector.broadcast %69 : vector<16x1xf32> to vector<16x8xf32>
    %71 = arith.select %68, %70, %40 : vector<16x8xi1>, vector<16x8xf32>
    %72 = vector.shape_cast %55 : vector<16x1xi32> to vector<16x1xi32>
    %73 = vector.broadcast %72 : vector<16x1xi32> to vector<16x8xi32>
    %74 = arith.select %68, %73, %43 : vector<16x8xi1>, vector<16x8xi32>
    %75 = vector.broadcast %55 : vector<16x1xi32> to vector<16x128xi32>
    %76 = arith.cmpi eq, %53, %75 : vector<16x128xi32>
    %cst_21 = arith.constant 0xFF800000 : f32
    %77 = vector.broadcast %cst_21 : f32 to vector<16x128xf32>
    %78 = arith.select %76, %77, %47 : vector<16x128xi1>, vector<16x128xf32>
    %cst_22 = arith.constant dense<0xFF800000> : vector<16xf32>
    %79 = vector.multi_reduction <maximumf>, %78, %cst_22 [1] : vector<16x128xf32> to vector<16xf32>
    %80 = vector.shape_cast %79 : vector<16xf32> to vector<16x1xf32>
    %81 = vector.broadcast %80 : vector<16x1xf32> to vector<16x128xf32>
    %82 = arith.cmpf oeq, %78, %81 : vector<16x128xf32>
    %c1073741824_i32_23 = arith.constant 1073741824 : i32
    %83 = vector.broadcast %c1073741824_i32_23 : i32 to vector<16x128xi32>
    %84 = arith.select %82, %9, %83 : vector<16x128xi1>, vector<16x128xi32>
    %cst_24 = arith.constant dense<2147483647> : vector<16xi32>
    %85 = vector.multi_reduction <minsi>, %84, %cst_24 [1] : vector<16x128xi32> to vector<16xi32>
    %86 = vector.shape_cast %85 : vector<16xi32> to vector<16x1xi32>
    %cst_25 = arith.constant dense<0x7F800000> : vector<16xf32>
    %87 = vector.multi_reduction <minimumf>, %71, %cst_25 [1] : vector<16x8xf32> to vector<16xf32>
    %88 = vector.shape_cast %87 : vector<16xf32> to vector<16x1xf32>
    %89 = vector.broadcast %88 : vector<16x1xf32> to vector<16x8xf32>
    %90 = arith.cmpf oeq, %71, %89 : vector<16x8xf32>
    %c1073741824_i32_26 = arith.constant 1073741824 : i32
    %91 = vector.broadcast %c1073741824_i32_26 : i32 to vector<16x8xi32>
    %92 = arith.select %90, %16, %91 : vector<16x8xi1>, vector<16x8xi32>
    %cst_27 = arith.constant dense<2147483647> : vector<16xi32>
    %93 = vector.multi_reduction <minsi>, %92, %cst_27 [1] : vector<16x8xi32> to vector<16xi32>
    %94 = vector.shape_cast %93 : vector<16xi32> to vector<16x1xi32>
    %95 = arith.cmpf ogt, %80, %88 : vector<16x1xf32>
    %96 = vector.broadcast %94 : vector<16x1xi32> to vector<16x8xi32>
    %97 = arith.cmpi eq, %16, %96 : vector<16x8xi32>
    %98 = vector.broadcast %95 : vector<16x1xi1> to vector<16x8xi1>
    %99 = arith.andi %97, %98 : vector<16x8xi1>
    %100 = vector.shape_cast %80 : vector<16x1xf32> to vector<16x1xf32>
    %101 = vector.broadcast %100 : vector<16x1xf32> to vector<16x8xf32>
    %102 = arith.select %99, %101, %71 : vector<16x8xi1>, vector<16x8xf32>
    %103 = vector.shape_cast %86 : vector<16x1xi32> to vector<16x1xi32>
    %104 = vector.broadcast %103 : vector<16x1xi32> to vector<16x8xi32>
    %105 = arith.select %99, %104, %74 : vector<16x8xi1>, vector<16x8xi32>
    %106 = vector.broadcast %86 : vector<16x1xi32> to vector<16x128xi32>
    %107 = arith.cmpi eq, %84, %106 : vector<16x128xi32>
    %cst_28 = arith.constant 0xFF800000 : f32
    %108 = vector.broadcast %cst_28 : f32 to vector<16x128xf32>
    %109 = arith.select %107, %108, %78 : vector<16x128xi1>, vector<16x128xf32>
    %cst_29 = arith.constant dense<0xFF800000> : vector<16xf32>
    %110 = vector.multi_reduction <maximumf>, %109, %cst_29 [1] : vector<16x128xf32> to vector<16xf32>
    %111 = vector.shape_cast %110 : vector<16xf32> to vector<16x1xf32>
    %112 = vector.broadcast %111 : vector<16x1xf32> to vector<16x128xf32>
    %113 = arith.cmpf oeq, %109, %112 : vector<16x128xf32>
    %c1073741824_i32_30 = arith.constant 1073741824 : i32
    %114 = vector.broadcast %c1073741824_i32_30 : i32 to vector<16x128xi32>
    %115 = arith.select %113, %9, %114 : vector<16x128xi1>, vector<16x128xi32>
    %cst_31 = arith.constant dense<2147483647> : vector<16xi32>
    %116 = vector.multi_reduction <minsi>, %115, %cst_31 [1] : vector<16x128xi32> to vector<16xi32>
    %117 = vector.shape_cast %116 : vector<16xi32> to vector<16x1xi32>
    %cst_32 = arith.constant dense<0x7F800000> : vector<16xf32>
    %118 = vector.multi_reduction <minimumf>, %102, %cst_32 [1] : vector<16x8xf32> to vector<16xf32>
    %119 = vector.shape_cast %118 : vector<16xf32> to vector<16x1xf32>
    %120 = vector.broadcast %119 : vector<16x1xf32> to vector<16x8xf32>
    %121 = arith.cmpf oeq, %102, %120 : vector<16x8xf32>
    %c1073741824_i32_33 = arith.constant 1073741824 : i32
    %122 = vector.broadcast %c1073741824_i32_33 : i32 to vector<16x8xi32>
    %123 = arith.select %121, %16, %122 : vector<16x8xi1>, vector<16x8xi32>
    %cst_34 = arith.constant dense<2147483647> : vector<16xi32>
    %124 = vector.multi_reduction <minsi>, %123, %cst_34 [1] : vector<16x8xi32> to vector<16xi32>
    %125 = vector.shape_cast %124 : vector<16xi32> to vector<16x1xi32>
    %126 = arith.cmpf ogt, %111, %119 : vector<16x1xf32>
    %127 = vector.broadcast %125 : vector<16x1xi32> to vector<16x8xi32>
    %128 = arith.cmpi eq, %16, %127 : vector<16x8xi32>
    %129 = vector.broadcast %126 : vector<16x1xi1> to vector<16x8xi1>
    %130 = arith.andi %128, %129 : vector<16x8xi1>
    %131 = vector.shape_cast %111 : vector<16x1xf32> to vector<16x1xf32>
    %132 = vector.broadcast %131 : vector<16x1xf32> to vector<16x8xf32>
    %133 = arith.select %130, %132, %102 : vector<16x8xi1>, vector<16x8xf32>
    %134 = vector.shape_cast %117 : vector<16x1xi32> to vector<16x1xi32>
    %135 = vector.broadcast %134 : vector<16x1xi32> to vector<16x8xi32>
    %136 = arith.select %130, %135, %105 : vector<16x8xi1>, vector<16x8xi32>
    %137 = vector.broadcast %117 : vector<16x1xi32> to vector<16x128xi32>
    %138 = arith.cmpi eq, %115, %137 : vector<16x128xi32>
    %cst_35 = arith.constant 0xFF800000 : f32
    %139 = vector.broadcast %cst_35 : f32 to vector<16x128xf32>
    %140 = arith.select %138, %139, %109 : vector<16x128xi1>, vector<16x128xf32>
    %cst_36 = arith.constant dense<0xFF800000> : vector<16xf32>
    %141 = vector.multi_reduction <maximumf>, %140, %cst_36 [1] : vector<16x128xf32> to vector<16xf32>
    %142 = vector.shape_cast %141 : vector<16xf32> to vector<16x1xf32>
    %143 = vector.broadcast %142 : vector<16x1xf32> to vector<16x128xf32>
    %144 = arith.cmpf oeq, %140, %143 : vector<16x128xf32>
    %c1073741824_i32_37 = arith.constant 1073741824 : i32
    %145 = vector.broadcast %c1073741824_i32_37 : i32 to vector<16x128xi32>
    %146 = arith.select %144, %9, %145 : vector<16x128xi1>, vector<16x128xi32>
    %cst_38 = arith.constant dense<2147483647> : vector<16xi32>
    %147 = vector.multi_reduction <minsi>, %146, %cst_38 [1] : vector<16x128xi32> to vector<16xi32>
    %148 = vector.shape_cast %147 : vector<16xi32> to vector<16x1xi32>
    %cst_39 = arith.constant dense<0x7F800000> : vector<16xf32>
    %149 = vector.multi_reduction <minimumf>, %133, %cst_39 [1] : vector<16x8xf32> to vector<16xf32>
    %150 = vector.shape_cast %149 : vector<16xf32> to vector<16x1xf32>
    %151 = vector.broadcast %150 : vector<16x1xf32> to vector<16x8xf32>
    %152 = arith.cmpf oeq, %133, %151 : vector<16x8xf32>
    %c1073741824_i32_40 = arith.constant 1073741824 : i32
    %153 = vector.broadcast %c1073741824_i32_40 : i32 to vector<16x8xi32>
    %154 = arith.select %152, %16, %153 : vector<16x8xi1>, vector<16x8xi32>
    %cst_41 = arith.constant dense<2147483647> : vector<16xi32>
    %155 = vector.multi_reduction <minsi>, %154, %cst_41 [1] : vector<16x8xi32> to vector<16xi32>
    %156 = vector.shape_cast %155 : vector<16xi32> to vector<16x1xi32>
    %157 = arith.cmpf ogt, %142, %150 : vector<16x1xf32>
    %158 = vector.broadcast %156 : vector<16x1xi32> to vector<16x8xi32>
    %159 = arith.cmpi eq, %16, %158 : vector<16x8xi32>
    %160 = vector.broadcast %157 : vector<16x1xi1> to vector<16x8xi1>
    %161 = arith.andi %159, %160 : vector<16x8xi1>
    %162 = vector.shape_cast %142 : vector<16x1xf32> to vector<16x1xf32>
    %163 = vector.broadcast %162 : vector<16x1xf32> to vector<16x8xf32>
    %164 = arith.select %161, %163, %133 : vector<16x8xi1>, vector<16x8xf32>
    %165 = vector.shape_cast %148 : vector<16x1xi32> to vector<16x1xi32>
    %166 = vector.broadcast %165 : vector<16x1xi32> to vector<16x8xi32>
    %167 = arith.select %161, %166, %136 : vector<16x8xi1>, vector<16x8xi32>
    %168 = vector.broadcast %148 : vector<16x1xi32> to vector<16x128xi32>
    %169 = arith.cmpi eq, %146, %168 : vector<16x128xi32>
    %cst_42 = arith.constant 0xFF800000 : f32
    %170 = vector.broadcast %cst_42 : f32 to vector<16x128xf32>
    %171 = arith.select %169, %170, %140 : vector<16x128xi1>, vector<16x128xf32>
    %cst_43 = arith.constant dense<0xFF800000> : vector<16xf32>
    %172 = vector.multi_reduction <maximumf>, %171, %cst_43 [1] : vector<16x128xf32> to vector<16xf32>
    %173 = vector.shape_cast %172 : vector<16xf32> to vector<16x1xf32>
    %174 = vector.broadcast %173 : vector<16x1xf32> to vector<16x128xf32>
    %175 = arith.cmpf oeq, %171, %174 : vector<16x128xf32>
    %c1073741824_i32_44 = arith.constant 1073741824 : i32
    %176 = vector.broadcast %c1073741824_i32_44 : i32 to vector<16x128xi32>
    %177 = arith.select %175, %9, %176 : vector<16x128xi1>, vector<16x128xi32>
    %cst_45 = arith.constant dense<2147483647> : vector<16xi32>
    %178 = vector.multi_reduction <minsi>, %177, %cst_45 [1] : vector<16x128xi32> to vector<16xi32>
    %179 = vector.shape_cast %178 : vector<16xi32> to vector<16x1xi32>
    %cst_46 = arith.constant dense<0x7F800000> : vector<16xf32>
    %180 = vector.multi_reduction <minimumf>, %164, %cst_46 [1] : vector<16x8xf32> to vector<16xf32>
    %181 = vector.shape_cast %180 : vector<16xf32> to vector<16x1xf32>
    %182 = vector.broadcast %181 : vector<16x1xf32> to vector<16x8xf32>
    %183 = arith.cmpf oeq, %164, %182 : vector<16x8xf32>
    %c1073741824_i32_47 = arith.constant 1073741824 : i32
    %184 = vector.broadcast %c1073741824_i32_47 : i32 to vector<16x8xi32>
    %185 = arith.select %183, %16, %184 : vector<16x8xi1>, vector<16x8xi32>
    %cst_48 = arith.constant dense<2147483647> : vector<16xi32>
    %186 = vector.multi_reduction <minsi>, %185, %cst_48 [1] : vector<16x8xi32> to vector<16xi32>
    %187 = vector.shape_cast %186 : vector<16xi32> to vector<16x1xi32>
    %188 = arith.cmpf ogt, %173, %181 : vector<16x1xf32>
    %189 = vector.broadcast %187 : vector<16x1xi32> to vector<16x8xi32>
    %190 = arith.cmpi eq, %16, %189 : vector<16x8xi32>
    %191 = vector.broadcast %188 : vector<16x1xi1> to vector<16x8xi1>
    %192 = arith.andi %190, %191 : vector<16x8xi1>
    %193 = vector.shape_cast %173 : vector<16x1xf32> to vector<16x1xf32>
    %194 = vector.broadcast %193 : vector<16x1xf32> to vector<16x8xf32>
    %195 = arith.select %192, %194, %164 : vector<16x8xi1>, vector<16x8xf32>
    %196 = vector.shape_cast %179 : vector<16x1xi32> to vector<16x1xi32>
    %197 = vector.broadcast %196 : vector<16x1xi32> to vector<16x8xi32>
    %198 = arith.select %192, %197, %167 : vector<16x8xi1>, vector<16x8xi32>
    %199 = vector.broadcast %179 : vector<16x1xi32> to vector<16x128xi32>
    %200 = arith.cmpi eq, %177, %199 : vector<16x128xi32>
    %cst_49 = arith.constant 0xFF800000 : f32
    %201 = vector.broadcast %cst_49 : f32 to vector<16x128xf32>
    %202 = arith.select %200, %201, %171 : vector<16x128xi1>, vector<16x128xf32>
    %cst_50 = arith.constant dense<0xFF800000> : vector<16xf32>
    %203 = vector.multi_reduction <maximumf>, %202, %cst_50 [1] : vector<16x128xf32> to vector<16xf32>
    %204 = vector.shape_cast %203 : vector<16xf32> to vector<16x1xf32>
    %205 = vector.broadcast %204 : vector<16x1xf32> to vector<16x128xf32>
    %206 = arith.cmpf oeq, %202, %205 : vector<16x128xf32>
    %c1073741824_i32_51 = arith.constant 1073741824 : i32
    %207 = vector.broadcast %c1073741824_i32_51 : i32 to vector<16x128xi32>
    %208 = arith.select %206, %9, %207 : vector<16x128xi1>, vector<16x128xi32>
    %cst_52 = arith.constant dense<2147483647> : vector<16xi32>
    %209 = vector.multi_reduction <minsi>, %208, %cst_52 [1] : vector<16x128xi32> to vector<16xi32>
    %210 = vector.shape_cast %209 : vector<16xi32> to vector<16x1xi32>
    %cst_53 = arith.constant dense<0x7F800000> : vector<16xf32>
    %211 = vector.multi_reduction <minimumf>, %195, %cst_53 [1] : vector<16x8xf32> to vector<16xf32>
    %212 = vector.shape_cast %211 : vector<16xf32> to vector<16x1xf32>
    %213 = vector.broadcast %212 : vector<16x1xf32> to vector<16x8xf32>
    %214 = arith.cmpf oeq, %195, %213 : vector<16x8xf32>
    %c1073741824_i32_54 = arith.constant 1073741824 : i32
    %215 = vector.broadcast %c1073741824_i32_54 : i32 to vector<16x8xi32>
    %216 = arith.select %214, %16, %215 : vector<16x8xi1>, vector<16x8xi32>
    %cst_55 = arith.constant dense<2147483647> : vector<16xi32>
    %217 = vector.multi_reduction <minsi>, %216, %cst_55 [1] : vector<16x8xi32> to vector<16xi32>
    %218 = vector.shape_cast %217 : vector<16xi32> to vector<16x1xi32>
    %219 = arith.cmpf ogt, %204, %212 : vector<16x1xf32>
    %220 = vector.broadcast %218 : vector<16x1xi32> to vector<16x8xi32>
    %221 = arith.cmpi eq, %16, %220 : vector<16x8xi32>
    %222 = vector.broadcast %219 : vector<16x1xi1> to vector<16x8xi1>
    %223 = arith.andi %221, %222 : vector<16x8xi1>
    %224 = vector.shape_cast %204 : vector<16x1xf32> to vector<16x1xf32>
    %225 = vector.broadcast %224 : vector<16x1xf32> to vector<16x8xf32>
    %226 = arith.select %223, %225, %195 : vector<16x8xi1>, vector<16x8xf32>
    %227 = vector.shape_cast %210 : vector<16x1xi32> to vector<16x1xi32>
    %228 = vector.broadcast %227 : vector<16x1xi32> to vector<16x8xi32>
    %229 = arith.select %223, %228, %198 : vector<16x8xi1>, vector<16x8xi32>
    %230 = vector.broadcast %210 : vector<16x1xi32> to vector<16x128xi32>
    %231 = arith.cmpi eq, %208, %230 : vector<16x128xi32>
    %cst_56 = arith.constant 0xFF800000 : f32
    %232 = vector.broadcast %cst_56 : f32 to vector<16x128xf32>
    %233 = arith.select %231, %232, %202 : vector<16x128xi1>, vector<16x128xf32>
    %cst_57 = arith.constant dense<0xFF800000> : vector<16xf32>
    %234 = vector.multi_reduction <maximumf>, %233, %cst_57 [1] : vector<16x128xf32> to vector<16xf32>
    %235 = vector.shape_cast %234 : vector<16xf32> to vector<16x1xf32>
    %236 = vector.broadcast %235 : vector<16x1xf32> to vector<16x128xf32>
    %237 = arith.cmpf oeq, %233, %236 : vector<16x128xf32>
    %c1073741824_i32_58 = arith.constant 1073741824 : i32
    %238 = vector.broadcast %c1073741824_i32_58 : i32 to vector<16x128xi32>
    %239 = arith.select %237, %9, %238 : vector<16x128xi1>, vector<16x128xi32>
    %cst_59 = arith.constant dense<2147483647> : vector<16xi32>
    %240 = vector.multi_reduction <minsi>, %239, %cst_59 [1] : vector<16x128xi32> to vector<16xi32>
    %241 = vector.shape_cast %240 : vector<16xi32> to vector<16x1xi32>
    %cst_60 = arith.constant dense<0x7F800000> : vector<16xf32>
    %242 = vector.multi_reduction <minimumf>, %226, %cst_60 [1] : vector<16x8xf32> to vector<16xf32>
    %243 = vector.shape_cast %242 : vector<16xf32> to vector<16x1xf32>
    %244 = vector.broadcast %243 : vector<16x1xf32> to vector<16x8xf32>
    %245 = arith.cmpf oeq, %226, %244 : vector<16x8xf32>
    %c1073741824_i32_61 = arith.constant 1073741824 : i32
    %246 = vector.broadcast %c1073741824_i32_61 : i32 to vector<16x8xi32>
    %247 = arith.select %245, %16, %246 : vector<16x8xi1>, vector<16x8xi32>
    %cst_62 = arith.constant dense<2147483647> : vector<16xi32>
    %248 = vector.multi_reduction <minsi>, %247, %cst_62 [1] : vector<16x8xi32> to vector<16xi32>
    %249 = vector.shape_cast %248 : vector<16xi32> to vector<16x1xi32>
    %250 = arith.cmpf ogt, %235, %243 : vector<16x1xf32>
    %251 = vector.broadcast %249 : vector<16x1xi32> to vector<16x8xi32>
    %252 = arith.cmpi eq, %16, %251 : vector<16x8xi32>
    %253 = vector.broadcast %250 : vector<16x1xi1> to vector<16x8xi1>
    %254 = arith.andi %252, %253 : vector<16x8xi1>
    %255 = vector.shape_cast %235 : vector<16x1xf32> to vector<16x1xf32>
    %256 = vector.broadcast %255 : vector<16x1xf32> to vector<16x8xf32>
    %257 = arith.select %254, %256, %226 : vector<16x8xi1>, vector<16x8xf32>
    %258 = vector.shape_cast %241 : vector<16x1xi32> to vector<16x1xi32>
    %259 = vector.broadcast %258 : vector<16x1xi32> to vector<16x8xi32>
    %260 = arith.select %254, %259, %229 : vector<16x8xi1>, vector<16x8xi32>
    %c0_63 = arith.constant 0 : index
    %c0_64 = arith.constant 0 : index
    %261 = vector.load %arg4[%c0_63, %c0_64] : memref<16x8xf32, #tpu.memory_space<vmem>>, vector<16x8xf32>
    tpu.vector_store %arg4[%c0_63, %c0_64], %257 {strides = array<i32>} : memref<16x8xf32, #tpu.memory_space<vmem>>, vector<16x8xf32>,
    %c0_65 = arith.constant 0 : index
    %c0_66 = arith.constant 0 : index
    %262 = vector.load %arg5[%c0_65, %c0_66] : memref<16x8xi32, #tpu.memory_space<vmem>>, vector<16x8xi32>
    tpu.vector_store %arg5[%c0_65, %c0_66], %260 {strides = array<i32>} : memref<16x8xi32, #tpu.memory_space<vmem>>, vector<16x8xi32>,
    return
  }
  func.func @transform_0(%arg0: i32, %arg1: i32) -> (i32, i32) {
    %c0_i32 = arith.constant 0 : i32
    %c0_i32_0 = arith.constant 0 : i32
    return %arg0, %c0_i32 : i32, i32
  }
  func.func @transform_1(%arg0: i32, %arg1: i32) -> (i32, i32) {
    %c0_i32 = arith.constant 0 : i32
    %c0_i32_0 = arith.constant 0 : i32
    return %c0_i32, %arg1 : i32, i32
  }
  func.func @transform_2(%arg0: i32, %arg1: i32) -> (i32, i32) {
    %c0_i32 = arith.constant 0 : i32
    %c0_i32_0 = arith.constant 0 : i32
    return %arg0, %c0_i32 : i32, i32
  }
  func.func @transform_3(%arg0: i32, %arg1: i32) -> (i32, i32) {
    %c0_i32 = arith.constant 0 : i32
    %c0_i32_0 = arith.constant 0 : i32
    return %arg0, %c0_i32 : i32, i32
  }
}

</mosaic_0001>

<llo_original>
// kernel: tpu_custom_call.1
$region0: #{tpu_custom_call.1}
  #allocation0 [shape = 'u32[]', space=smem, size = 0x4, offset = 0x4, fixed_abs, tag = 'smem constant byte address 0x4 - core index']
  #allocation1 [shape = 'u32[72,128]{1,0:T(1,128)}', space=vmem, size = 0x9000, scoped, tag = 'internal scratch']
  %s0 = inlined_call_operand.hbm [shape: bf16[16,16], index: 0, kind: input, shape index: {}]
  %s1 = inlined_call_operand.hbm [shape: bf16[16,128], index: 1, kind: input, shape index: {}]
  %s2 = inlined_call_operand.vmem [shape: f32[16,8], index: 2, kind: output, shape index: {0}]
  %s3 = inlined_call_operand.vmem [shape: s32[16,8], index: 3, kind: output, shape index: {1}]
  %4 = xla_tuple %s2, %s3
  %s5 = sld [smem:[#allocation0]]
  $region38: #{tpu_custom_call.1} parent=0
    _
  %s7 = ssub.s32 1, %s5
  %s8 = scalar_select 0, %s7, %s5
  $region1: #{tpu_custom_call.1} parent=0
    #allocation2 [shape = 'u8[4096]{0}', space=vmem, size = 0x1000, scoped, tag = 'input window, operand 0, single buffered']
    #allocation3 [shape = 's32[1]{0}', space=sflag, size = 0x4, scoped, tag = 'scoped memory for tpu_custom_call.1']
    #allocation4 [shape = 'u8[4096]{0}', space=vmem, size = 0x1000, scoped, tag = 'input window, operand 1, single buffered']
    #allocation5 [shape = 's32[1]{0}', space=sflag, size = 0x4, scoped, tag = 'scoped memory for tpu_custom_call.1']
    %9 = vsyncpa [#allocation3], 0
    %10 = vsyncpa [#allocation5], 0
    // Predicated region
    $region2: #{tpu_custom_call.1} parent=1 // pred_check
      _
    $region3: #{tpu_custom_call.1} parent=1 // pred_check_branch
      %12 = sbr.rel (0) target = $region5
    $region4: #{tpu_custom_call.1} parent=1 // pred_region
      %14 = vsyncadd [#allocation3], 0
      %s15 = sshll.u32 %s0, 4
      %s16 = int_to_ptr.hbm [resolvable:$true] %s15
      %s17 = sshll.u32 [#allocation2], 4
      %s18 = int_to_ptr.vmem [resolvable:$true] %s17
      %23 = dma.hbm_to_vmem [thread:$0]  %s16, 128, %s18, [#allocation3], 64, 64, 4
    $region5: #{tpu_custom_call.1} parent=1 // pred_fallthru
      _
    // Predicated region
    $region6: #{tpu_custom_call.1} parent=1 // pred_check
      _
    $region7: #{tpu_custom_call.1} parent=1 // pred_check_branch
      %25 = sbr.rel (0) target = $region9
    $region8: #{tpu_custom_call.1} parent=1 // pred_region
      %27 = vsyncadd [#allocation5], 0
      %s28 = sshll.u32 %s1, 4
      %s29 = int_to_ptr.hbm [resolvable:$true] %s28
      %s30 = sshll.u32 [#allocation4], 4
      %s31 = int_to_ptr.vmem [resolvable:$true] %s30
      %36 = dma.hbm_to_vmem [thread:$0]  %s29, 128, %s31, [#allocation5], 64, 64, 4
    $region9: #{tpu_custom_call.1} parent=1 // pred_fallthru
      _
    // Predicated region
    $region10: #{tpu_custom_call.1} parent=1 // pred_check
      _
    $region11: #{tpu_custom_call.1} parent=1 // pred_check_branch
      %38 = sbr.rel (0) target = $region13
    $region12: #{tpu_custom_call.1} parent=1 // pred_region
      %40 = dma.done [#allocation3], 128
    $region13: #{tpu_custom_call.1} parent=1 // pred_fallthru
      _
    // Predicated region
    $region14: #{tpu_custom_call.1} parent=1 // pred_check
      _
    $region15: #{tpu_custom_call.1} parent=1 // pred_check_branch
      %42 = sbr.rel (0) target = $region17
    $region16: #{tpu_custom_call.1} parent=1 // pred_region
      %44 = dma.done [#allocation5], 128
    $region17: #{tpu_custom_call.1} parent=1 // pred_fallthru
      _
    %p46 = scmp.eq.s32.totalorder 0, 0
    // Predicated region
    $region18: #{tpu_custom_call.1} parent=1 // pred_check
      %p47 = pneg %p46
    $region19: #{tpu_custom_call.1} parent=1 // pred_check_branch
      %49 = sbr.rel (%p47) target = $region21
    $region20: #{tpu_custom_call.1} parent=1 // pred_region
      %vm50 = vcmask 64512
      %51 = vst.msk [vmem:[%s2] sm:$0xff] %vm50, -inf
      %52 = vst.msk [vmem:[%s2 + $0x8] sm:$0xff] %vm50, -inf
      %53 = vst.msk [vmem:[%s3] sm:$0xff] %vm50, 0
      %54 = vst.msk [vmem:[%s3 + $0x8] sm:$0xff] %vm50, 0
    $region21: #{tpu_custom_call.1} parent=1 // pred_fallthru
      _
    %v55 = vld [vmem:[#allocation2] sm:$0xf]
    %v56 = vld [vmem:[#allocation2 + $0x4] sm:$0xf]
    %v57 = vld [vmem:[#allocation4] sm:$0xf]
    %v58 = vld [vmem:[#allocation4 + $0x4] sm:$0xf]
    %v61 = vunpack.c.l.b16 %v55
    %v62 = vunpack.c.l.b16 %v56
    %v63 = vpack.c.b16 %v62, %v61
    %v66 = vunpack.c.l.b16 %v57
    %v67 = vunpack.c.l.b16 %v58
    %v68 = vpack.c.b16 %v67, %v66
    %vm70 = vcmask 130048
    %v72 = vsel %vm70, %v63, 0
    %74 = vmatpush.bf16.msra.mxu0 0
    %75 = vmatpush.bf16.msra.mxu0 0
    %76 = vmatpush.bf16.msra.mxu0 0
    %77 = vmatpush.bf16.msra.mxu0 0
    %78 = vmatpush.bf16.msra.mxu0 0
    %79 = vmatpush.bf16.msra.mxu0 0
    %80 = vmatpush.bf16.msra.mxu0 0
    %81 = vmatpush.bf16.msra.mxu0 %v68
    %82 = vmatmul.bf16.gmra.mxu0 %v72
    %v83 = vpop.f32.mrf.mxu0
    %v84 = vadd.f32 0.0, %v83
    %v85 = vpop.f32.mrf.mxu0
    %v86 = vadd.f32 0.0, %v85
    %87 = vdwg.mxu0
    %s88 = smul.u32 0, 128
    %v89 = vlaneseq
    %v90 = vand.u32 %v89, 127
    %v91 = vstv %s88
    %v92 = vadd.s32 %v91, %v90
    %vm93 = vcmp.lt.s32.totalorder %v92, 16
    %v94 = vsel %vm93, %v84, -inf
    %v95 = vsel %vm93, %v86, -inf
    %v96 = vld [vmem:[%s2] sm:$0xff]
    %v97 = vld [vmem:[%s2 + $0x8] sm:$0xff]
    %v98 = vld [vmem:[%s3] sm:$0xff]
    %v99 = vld [vmem:[%s3 + $0x8] sm:$0xff]
    %100 = vmax.xlane.f32.xlu0 %v94
    %v101 = vpop.xlane.xlu0 %100
    %102 = vmax.xlane.f32.xlu0 %v95
    %v103 = vpop.xlane.xlu0 %102
    %vm104 = vcmp.eq.f32.partialorder %v94, %v101
    %vm105 = vcmp.eq.f32.partialorder %v95, %v103
    %v106 = vsel %vm104, %v92, 1073741824
    %v107 = vsel %vm105, %v92, 1073741824
    %v108 = vand.u32 %v106, 65535
    %v109 = vshra.s32 %v106, 16
    %v110 = vcvt.s32.f32 %v108
    %v111 = vcvt.s32.f32 %v109
    %112 = vmin.xlane.f32.xlu0 %v111
    %v113 = vpop.xlane.xlu0 %112
    %vm114 = vcmp.eq.f32.partialorder %v111, %v113
    %v115 = vsel %vm114, %v110, inf
    %116 = vmin.xlane.f32.xlu0 %v115
    %v117 = vpop.xlane.xlu0 %116
    %v118 = vcvt.f32.s32 %v117
    %v119 = vcvt.f32.s32 %v113
    %v120 = vshll.u32 %v119, 16
    %v121 = vadd.s32 %v120, %v118
    %v122 = vand.u32 %v107, 65535
    %v123 = vshra.s32 %v107, 16
    %v124 = vcvt.s32.f32 %v122
    %v125 = vcvt.s32.f32 %v123
    %126 = vmin.xlane.f32.xlu0 %v125
    %v127 = vpop.xlane.xlu0 %126
    %vm128 = vcmp.eq.f32.partialorder %v125, %v127
    %v129 = vsel %vm128, %v124, inf
    %130 = vmin.xlane.f32.xlu0 %v129
    %v131 = vpop.xlane.xlu0 %130
    %v132 = vcvt.f32.s32 %v131
    %v133 = vcvt.f32.s32 %v127
    %v134 = vshll.u32 %v133, 16
    %v135 = vadd.s32 %v134, %v132
    %vm136 = vcmask 64512
    %v137 = vsel %vm136, %v96, inf
    %138 = vmin.xlane.f32.xlu0 %v137
    %v139 = vpop.xlane.xlu0 %138
    %v140 = vsel %vm136, %v97, inf
    %141 = vmin.xlane.f32.xlu0 %v140
    %v142 = vpop.xlane.xlu0 %141
    %vm143 = vcmp.eq.f32.partialorder %v96, %v139
    %vm144 = vcmp.eq.f32.partialorder %v97, %v142
    %v145 = vsel %vm143, %v90, 1073741824
    %v146 = vsel %vm144, %v90, 1073741824
    %v147 = vsel %vm136, %v145, 2147483647
    %v148 = vand.u32 %v147, 65535
    %v149 = vshra.s32 %v147, 16
    %v150 = vcvt.s32.f32 %v148
    %v151 = vcvt.s32.f32 %v149
    %152 = vmin.xlane.f32.xlu0 %v151
    %v153 = vpop.xlane.xlu0 %152
    %vm154 = vcmp.eq.f32.partialorder %v151, %v153
    %v155 = vsel %vm154, %v150, inf
    %156 = vmin.xlane.f32.xlu0 %v155
    %v157 = vpop.xlane.xlu0 %156
    %v158 = vcvt.f32.s32 %v157
    %v159 = vcvt.f32.s32 %v153
    %v160 = vshll.u32 %v159, 16
    %v161 = vadd.s32 %v160, %v158
    %v162 = vsel %vm136, %v146, 2147483647
    %v163 = vand.u32 %v162, 65535
    %v164 = vshra.s32 %v162, 16
    %v165 = vcvt.s32.f32 %v163
    %v166 = vcvt.s32.f32 %v164
    %167 = vmin.xlane.f32.xlu0 %v166
    %v168 = vpop.xlane.xlu0 %167
    %vm169 = vcmp.eq.f32.partialorder %v166, %v168
    %v170 = vsel %vm169, %v165, inf
    %171 = vmin.xlane.f32.xlu0 %v170
    %v172 = vpop.xlane.xlu0 %171
    %v173 = vcvt.f32.s32 %v172
    %v174 = vcvt.f32.s32 %v168
    %v175 = vshll.u32 %v174, 16
    %v176 = vadd.s32 %v175, %v173
    %vm177 = vcmp.gt.f32.partialorder %v101, %v139
    %vm178 = vcmp.gt.f32.partialorder %v103, %v142
    %vm179 = vcmp.eq.s32.totalorder %v90, %v161
    %vm180 = vcmp.eq.s32.totalorder %v90, %v176
    %v181 = vsel %vm177, 1, 0
    %v182 = vsel %vm178, 1, 0
    %vm183 = vcmp.eq.s32.totalorder %v181, 1
    %vm184 = vcmp.eq.s32.totalorder %v182, 1
    %vm185 = vmand %vm179, %vm183
    %vm186 = vmand %vm180, %vm184
    %v187 = vsel %vm185, %v101, %v96
    %v188 = vsel %vm186, %v103, %v97
    %v189 = vsel %vm185, %v121, %v98
    %v190 = vsel %vm186, %v135, %v99
    %vm191 = vcmp.eq.s32.totalorder %v106, %v121
    %vm192 = vcmp.eq.s32.totalorder %v107, %v135
    %v193 = vsel %vm191, -inf, %v94
    %v194 = vsel %vm192, -inf, %v95
    %195 = vmax.xlane.f32.xlu0 %v193
    %v196 = vpop.xlane.xlu0 %195
    %197 = vmax.xlane.f32.xlu0 %v194
    %v198 = vpop.xlane.xlu0 %197
    %vm199 = vcmp.eq.f32.partialorder %v193, %v196
    %vm200 = vcmp.eq.f32.partialorder %v194, %v198
    %v201 = vsel %vm199, %v92, 1073741824
    %v202 = vsel %vm200, %v92, 1073741824
    %v203 = vand.u32 %v201, 65535
    %v204 = vshra.s32 %v201, 16
    %v205 = vcvt.s32.f32 %v203
    %v206 = vcvt.s32.f32 %v204
    %207 = vmin.xlane.f32.xlu0 %v206
    %v208 = vpop.xlane.xlu0 %207
    %vm209 = vcmp.eq.f32.partialorder %v206, %v208
    %v210 = vsel %vm209, %v205, inf
    %211 = vmin.xlane.f32.xlu0 %v210
    %v212 = vpop.xlane.xlu0 %211
    %v213 = vcvt.f32.s32 %v212
    %v214 = vcvt.f32.s32 %v208
    %v215 = vshll.u32 %v214, 16
    %v216 = vadd.s32 %v215, %v213
    %v217 = vand.u32 %v202, 65535
    %v218 = vshra.s32 %v202, 16
    %v219 = vcvt.s32.f32 %v217
    %v220 = vcvt.s32.f32 %v218
    %221 = vmin.xlane.f32.xlu0 %v220
    %v222 = vpop.xlane.xlu0 %221
    %vm223 = vcmp.eq.f32.partialorder %v220, %v222
    %v224 = vsel %vm223, %v219, inf
    %225 = vmin.xlane.f32.xlu0 %v224
    %v226 = vpop.xlane.xlu0 %225
    %v227 = vcvt.f32.s32 %v226
    %v228 = vcvt.f32.s32 %v222
    %v229 = vshll.u32 %v228, 16
    %v230 = vadd.s32 %v229, %v227
    %v231 = vsel %vm136, %v187, inf
    %232 = vmin.xlane.f32.xlu0 %v231
    %v233 = vpop.xlane.xlu0 %232
    %v234 = vsel %vm136, %v188, inf
    %235 = vmin.xlane.f32.xlu0 %v234
    %v236 = vpop.xlane.xlu0 %235
    %vm237 = vcmp.eq.f32.partialorder %v187, %v233
    %vm238 = vcmp.eq.f32.partialorder %v188, %v236
    %v239 = vsel %vm237, %v90, 1073741824
    %v240 = vsel %vm238, %v90, 1073741824
    %v241 = vsel %vm136, %v239, 2147483647
    %v242 = vand.u32 %v241, 65535
    %v243 = vshra.s32 %v241, 16
    %v244 = vcvt.s32.f32 %v242
    %v245 = vcvt.s32.f32 %v243
    %246 = vmin.xlane.f32.xlu0 %v245
    %v247 = vpop.xlane.xlu0 %246
    %vm248 = vcmp.eq.f32.partialorder %v245, %v247
    %v249 = vsel %vm248, %v244, inf
    %250 = vmin.xlane.f32.xlu0 %v249
    %v251 = vpop.xlane.xlu0 %250
    %v252 = vcvt.f32.s32 %v251
    %v253 = vcvt.f32.s32 %v247
    %v254 = vshll.u32 %v253, 16
    %v255 = vadd.s32 %v254, %v252
    %v256 = vsel %vm136, %v240, 2147483647
    %v257 = vand.u32 %v256, 65535
    %v258 = vshra.s32 %v256, 16
    %v259 = vcvt.s32.f32 %v257
    %v260 = vcvt.s32.f32 %v258
    %261 = vmin.xlane.f32.xlu0 %v260
    %v262 = vpop.xlane.xlu0 %261
    %vm263 = vcmp.eq.f32.partialorder %v260, %v262
    %v264 = vsel %vm263, %v259, inf
    %265 = vmin.xlane.f32.xlu0 %v264
    %v266 = vpop.xlane.xlu0 %265
    %v267 = vcvt.f32.s32 %v266
    %v268 = vcvt.f32.s32 %v262
    %v269 = vshll.u32 %v268, 16
    %v270 = vadd.s32 %v269, %v267
    %vm271 = vcmp.gt.f32.partialorder %v196, %v233
    %vm272 = vcmp.gt.f32.partialorder %v198, %v236
    %vm273 = vcmp.eq.s32.totalorder %v90, %v255
    %vm274 = vcmp.eq.s32.totalorder %v90, %v270
    %v275 = vsel %vm271, 1, 0
    %v276 = vsel %vm272, 1, 0
    %vm277 = vcmp.eq.s32.totalorder %v275, 1
    %vm278 = vcmp.eq.s32.totalorder %v276, 1
    %vm279 = vmand %vm273, %vm277
    %vm280 = vmand %vm274, %vm278
    %v281 = vsel %vm279, %v196, %v187
    %v282 = vsel %vm280, %v198, %v188
    %v283 = vsel %vm279, %v216, %v189
    %v284 = vsel %vm280, %v230, %v190
    %vm285 = vcmp.eq.s32.totalorder %v201, %v216
    %vm286 = vcmp.eq.s32.totalorder %v202, %v230
    %v287 = vsel %vm285, -inf, %v193
    %v288 = vsel %vm286, -inf, %v194
    %289 = vmax.xlane.f32.xlu0 %v287
    %v290 = vpop.xlane.xlu0 %289
    %291 = vmax.xlane.f32.xlu0 %v288
    %v292 = vpop.xlane.xlu0 %291
    %vm293 = vcmp.eq.f32.partialorder %v287, %v290
    %vm294 = vcmp.eq.f32.partialorder %v288, %v292
    %v295 = vsel %vm293, %v92, 1073741824
    %v296 = vsel %vm294, %v92, 1073741824
    %v297 = vand.u32 %v295, 65535
    %v298 = vshra.s32 %v295, 16
    %v299 = vcvt.s32.f32 %v297
    %v300 = vcvt.s32.f32 %v298
    %301 = vmin.xlane.f32.xlu0 %v300
    %v302 = vpop.xlane.xlu0 %301
    %vm303 = vcmp.eq.f32.partialorder %v300, %v302
    %v304 = vsel %vm303, %v299, inf
    %305 = vmin.xlane.f32.xlu0 %v304
    %v306 = vpop.xlane.xlu0 %305
    %v307 = vcvt.f32.s32 %v306
    %v308 = vcvt.f32.s32 %v302
    %v309 = vshll.u32 %v308, 16
    %v310 = vadd.s32 %v309, %v307
    %v311 = vand.u32 %v296, 65535
    %v312 = vshra.s32 %v296, 16
    %v313 = vcvt.s32.f32 %v311
    %v314 = vcvt.s32.f32 %v312
    %315 = vmin.xlane.f32.xlu0 %v314
    %v316 = vpop.xlane.xlu0 %315
    %vm317 = vcmp.eq.f32.partialorder %v314, %v316
    %v318 = vsel %vm317, %v313, inf
    %319 = vmin.xlane.f32.xlu0 %v318
    %v320 = vpop.xlane.xlu0 %319
    %v321 = vcvt.f32.s32 %v320
    %v322 = vcvt.f32.s32 %v316
    %v323 = vshll.u32 %v322, 16
    %v324 = vadd.s32 %v323, %v321
    %v325 = vsel %vm136, %v281, inf
    %326 = vmin.xlane.f32.xlu0 %v325
    %v327 = vpop.xlane.xlu0 %326
    %v328 = vsel %vm136, %v282, inf
    %329 = vmin.xlane.f32.xlu0 %v328
    %v330 = vpop.xlane.xlu0 %329
    %vm331 = vcmp.eq.f32.partialorder %v281, %v327
    %vm332 = vcmp.eq.f32.partialorder %v282, %v330
    %v333 = vsel %vm331, %v90, 1073741824
    %v334 = vsel %vm332, %v90, 1073741824
    %v335 = vsel %vm136, %v333, 2147483647
    %v336 = vand.u32 %v335, 65535
    %v337 = vshra.s32 %v335, 16
    %v338 = vcvt.s32.f32 %v336
    %v339 = vcvt.s32.f32 %v337
    %340 = vmin.xlane.f32.xlu0 %v339
    %v341 = vpop.xlane.xlu0 %340
    %vm342 = vcmp.eq.f32.partialorder %v339, %v341
    %v343 = vsel %vm342, %v338, inf
    %344 = vmin.xlane.f32.xlu0 %v343
    %v345 = vpop.xlane.xlu0 %344
    %v346 = vcvt.f32.s32 %v345
    %v347 = vcvt.f32.s32 %v341
    %v348 = vshll.u32 %v347, 16
    %v349 = vadd.s32 %v348, %v346
    %v350 = vsel %vm136, %v334, 2147483647
    %v351 = vand.u32 %v350, 65535
    %v352 = vshra.s32 %v350, 16
    %v353 = vcvt.s32.f32 %v351
    %v354 = vcvt.s32.f32 %v352
    %355 = vmin.xlane.f32.xlu0 %v354
    %v356 = vpop.xlane.xlu0 %355
    %vm357 = vcmp.eq.f32.partialorder %v354, %v356
    %v358 = vsel %vm357, %v353, inf
    %359 = vmin.xlane.f32.xlu0 %v358
    %v360 = vpop.xlane.xlu0 %359
    %v361 = vcvt.f32.s32 %v360
    %v362 = vcvt.f32.s32 %v356
    %v363 = vshll.u32 %v362, 16
    %v364 = vadd.s32 %v363, %v361
    %vm365 = vcmp.gt.f32.partialorder %v290, %v327
    %vm366 = vcmp.gt.f32.partialorder %v292, %v330
    %vm367 = vcmp.eq.s32.totalorder %v90, %v349
    %vm368 = vcmp.eq.s32.totalorder %v90, %v364
    %v369 = vsel %vm365, 1, 0
    %v370 = vsel %vm366, 1, 0
    %vm371 = vcmp.eq.s32.totalorder %v369, 1
    %vm372 = vcmp.eq.s32.totalorder %v370, 1
    %vm373 = vmand %vm367, %vm371
    %vm374 = vmand %vm368, %vm372
    %v375 = vsel %vm373, %v290, %v281
    %v376 = vsel %vm374, %v292, %v282
    %v377 = vsel %vm373, %v310, %v283
    %v378 = vsel %vm374, %v324, %v284
    %vm379 = vcmp.eq.s32.totalorder %v295, %v310
    %vm380 = vcmp.eq.s32.totalorder %v296, %v324
    %v381 = vsel %vm379, -inf, %v287
    %v382 = vsel %vm380, -inf, %v288
    %383 = vmax.xlane.f32.xlu0 %v381
    %v384 = vpop.xlane.xlu0 %383
    %385 = vmax.xlane.f32.xlu0 %v382
    %v386 = vpop.xlane.xlu0 %385
    %vm387 = vcmp.eq.f32.partialorder %v381, %v384
    %vm388 = vcmp.eq.f32.partialorder %v382, %v386
    %v389 = vsel %vm387, %v92, 1073741824
    %v390 = vsel %vm388, %v92, 1073741824
    %v391 = vand.u32 %v389, 65535
    %v392 = vshra.s32 %v389, 16
    %v393 = vcvt.s32.f32 %v391
    %v394 = vcvt.s32.f32 %v392
    %395 = vmin.xlane.f32.xlu0 %v394
    %v396 = vpop.xlane.xlu0 %395
    %vm397 = vcmp.eq.f32.partialorder %v394, %v396
    %v398 = vsel %vm397, %v393, inf
    %399 = vmin.xlane.f32.xlu0 %v398
    %v400 = vpop.xlane.xlu0 %399
    %v401 = vcvt.f32.s32 %v400
    %v402 = vcvt.f32.s32 %v396
    %v403 = vshll.u32 %v402, 16
    %v404 = vadd.s32 %v403, %v401
    %v405 = vand.u32 %v390, 65535
    %v406 = vshra.s32 %v390, 16
    %v407 = vcvt.s32.f32 %v405
    %v408 = vcvt.s32.f32 %v406
    %409 = vmin.xlane.f32.xlu0 %v408
    %v410 = vpop.xlane.xlu0 %409
    %vm411 = vcmp.eq.f32.partialorder %v408, %v410
    %v412 = vsel %vm411, %v407, inf
    %413 = vmin.xlane.f32.xlu0 %v412
    %v414 = vpop.xlane.xlu0 %413
    %v415 = vcvt.f32.s32 %v414
    %v416 = vcvt.f32.s32 %v410
    %v417 = vshll.u32 %v416, 16
    %v418 = vadd.s32 %v417, %v415
    %v419 = vsel %vm136, %v375, inf
    %420 = vmin.xlane.f32.xlu0 %v419
    %v421 = vpop.xlane.xlu0 %420
    %v422 = vsel %vm136, %v376, inf
    %423 = vmin.xlane.f32.xlu0 %v422
    %v424 = vpop.xlane.xlu0 %423
    %vm425 = vcmp.eq.f32.partialorder %v375, %v421
    %vm426 = vcmp.eq.f32.partialorder %v376, %v424
    %v427 = vsel %vm425, %v90, 1073741824
    %v428 = vsel %vm426, %v90, 1073741824
    %v429 = vsel %vm136, %v427, 2147483647
    %v430 = vand.u32 %v429, 65535
    %v431 = vshra.s32 %v429, 16
    %v432 = vcvt.s32.f32 %v430
    %v433 = vcvt.s32.f32 %v431
    %434 = vmin.xlane.f32.xlu0 %v433
    %v435 = vpop.xlane.xlu0 %434
    %vm436 = vcmp.eq.f32.partialorder %v433, %v435
    %v437 = vsel %vm436, %v432, inf
    %438 = vmin.xlane.f32.xlu0 %v437
    %v439 = vpop.xlane.xlu0 %438
    %v440 = vcvt.f32.s32 %v439
    %v441 = vcvt.f32.s32 %v435
    %v442 = vshll.u32 %v441, 16
    %v443 = vadd.s32 %v442, %v440
    %v444 = vsel %vm136, %v428, 2147483647
    %v445 = vand.u32 %v444, 65535
    %v446 = vshra.s32 %v444, 16
    %v447 = vcvt.s32.f32 %v445
    %v448 = vcvt.s32.f32 %v446
    %449 = vmin.xlane.f32.xlu0 %v448
    %v450 = vpop.xlane.xlu0 %449
    %vm451 = vcmp.eq.f32.partialorder %v448, %v450
    %v452 = vsel %vm451, %v447, inf
    %453 = vmin.xlane.f32.xlu0 %v452
    %v454 = vpop.xlane.xlu0 %453
    %v455 = vcvt.f32.s32 %v454
    %v456 = vcvt.f32.s32 %v450
    %v457 = vshll.u32 %v456, 16
    %v458 = vadd.s32 %v457, %v455
    %vm459 = vcmp.gt.f32.partialorder %v384, %v421
    %vm460 = vcmp.gt.f32.partialorder %v386, %v424
    %vm461 = vcmp.eq.s32.totalorder %v90, %v443
    %vm462 = vcmp.eq.s32.totalorder %v90, %v458
    %v463 = vsel %vm459, 1, 0
    %v464 = vsel %vm460, 1, 0
    %vm465 = vcmp.eq.s32.totalorder %v463, 1
    %vm466 = vcmp.eq.s32.totalorder %v464, 1
    %vm467 = vmand %vm461, %vm465
    %vm468 = vmand %vm462, %vm466
    %v469 = vsel %vm467, %v384, %v375
    %v470 = vsel %vm468, %v386, %v376
    %v471 = vsel %vm467, %v404, %v377
    %v472 = vsel %vm468, %v418, %v378
    %vm473 = vcmp.eq.s32.totalorder %v389, %v404
    %vm474 = vcmp.eq.s32.totalorder %v390, %v418
    %v475 = vsel %vm473, -inf, %v381
    %v476 = vsel %vm474, -inf, %v382
    %477 = vmax.xlane.f32.xlu0 %v475
    %v478 = vpop.xlane.xlu0 %477
    %479 = vmax.xlane.f32.xlu0 %v476
    %v480 = vpop.xlane.xlu0 %479
    %vm481 = vcmp.eq.f32.partialorder %v475, %v478
    %vm482 = vcmp.eq.f32.partialorder %v476, %v480
    %v483 = vsel %vm481, %v92, 1073741824
    %v484 = vsel %vm482, %v92, 1073741824
    %v485 = vand.u32 %v483, 65535
    %v486 = vshra.s32 %v483, 16
    %v487 = vcvt.s32.f32 %v485
    %v488 = vcvt.s32.f32 %v486
    %489 = vmin.xlane.f32.xlu0 %v488
    %v490 = vpop.xlane.xlu0 %489
    %vm491 = vcmp.eq.f32.partialorder %v488, %v490
    %v492 = vsel %vm491, %v487, inf
    %493 = vmin.xlane.f32.xlu0 %v492
    %v494 = vpop.xlane.xlu0 %493
    %v495 = vcvt.f32.s32 %v494
    %v496 = vcvt.f32.s32 %v490
    %v497 = vshll.u32 %v496, 16
    %v498 = vadd.s32 %v497, %v495
    %v499 = vand.u32 %v484, 65535
    %v500 = vshra.s32 %v484, 16
    %v501 = vcvt.s32.f32 %v499
    %v502 = vcvt.s32.f32 %v500
    %503 = vmin.xlane.f32.xlu0 %v502
    %v504 = vpop.xlane.xlu0 %503
    %vm505 = vcmp.eq.f32.partialorder %v502, %v504
    %v506 = vsel %vm505, %v501, inf
    %507 = vmin.xlane.f32.xlu0 %v506
    %v508 = vpop.xlane.xlu0 %507
    %v509 = vcvt.f32.s32 %v508
    %v510 = vcvt.f32.s32 %v504
    %v511 = vshll.u32 %v510, 16
    %v512 = vadd.s32 %v511, %v509
    %v513 = vsel %vm136, %v469, inf
    %514 = vmin.xlane.f32.xlu0 %v513
    %v515 = vpop.xlane.xlu0 %514
    %v516 = vsel %vm136, %v470, inf
    %517 = vmin.xlane.f32.xlu0 %v516
    %v518 = vpop.xlane.xlu0 %517
    %vm519 = vcmp.eq.f32.partialorder %v469, %v515
    %vm520 = vcmp.eq.f32.partialorder %v470, %v518
    %v521 = vsel %vm519, %v90, 1073741824
    %v522 = vsel %vm520, %v90, 1073741824
    %v523 = vsel %vm136, %v521, 2147483647
    %v524 = vand.u32 %v523, 65535
    %v525 = vshra.s32 %v523, 16
    %v526 = vcvt.s32.f32 %v524
    %v527 = vcvt.s32.f32 %v525
    %528 = vmin.xlane.f32.xlu0 %v527
    %v529 = vpop.xlane.xlu0 %528
    %vm530 = vcmp.eq.f32.partialorder %v527, %v529
    %v531 = vsel %vm530, %v526, inf
    %532 = vmin.xlane.f32.xlu0 %v531
    %v533 = vpop.xlane.xlu0 %532
    %v534 = vcvt.f32.s32 %v533
    %v535 = vcvt.f32.s32 %v529
    %v536 = vshll.u32 %v535, 16
    %v537 = vadd.s32 %v536, %v534
    %v538 = vsel %vm136, %v522, 2147483647
    %v539 = vand.u32 %v538, 65535
    %v540 = vshra.s32 %v538, 16
    %v541 = vcvt.s32.f32 %v539
    %v542 = vcvt.s32.f32 %v540
    %543 = vmin.xlane.f32.xlu0 %v542
    %v544 = vpop.xlane.xlu0 %543
    %vm545 = vcmp.eq.f32.partialorder %v542, %v544
    %v546 = vsel %vm545, %v541, inf
    %547 = vmin.xlane.f32.xlu0 %v546
    %v548 = vpop.xlane.xlu0 %547
    %v549 = vcvt.f32.s32 %v548
    %v550 = vcvt.f32.s32 %v544
    %v551 = vshll.u32 %v550, 16
    %v552 = vadd.s32 %v551, %v549
    %vm553 = vcmp.gt.f32.partialorder %v478, %v515
    %vm554 = vcmp.gt.f32.partialorder %v480, %v518
    %vm555 = vcmp.eq.s32.totalorder %v90, %v537
    %vm556 = vcmp.eq.s32.totalorder %v90, %v552
    %v557 = vsel %vm553, 1, 0
    %v558 = vsel %vm554, 1, 0
    %vm559 = vcmp.eq.s32.totalorder %v557, 1
    %vm560 = vcmp.eq.s32.totalorder %v558, 1
    %vm561 = vmand %vm555, %vm559
    %vm562 = vmand %vm556, %vm560
    %v563 = vsel %vm561, %v478, %v469
    %v564 = vsel %vm562, %v480, %v470
    %v565 = vsel %vm561, %v498, %v471
    %v566 = vsel %vm562, %v512, %v472
    %vm567 = vcmp.eq.s32.totalorder %v483, %v498
    %vm568 = vcmp.eq.s32.totalorder %v484, %v512
    %v569 = vsel %vm567, -inf, %v475
    %v570 = vsel %vm568, -inf, %v476
    %571 = vmax.xlane.f32.xlu0 %v569
    %v572 = vpop.xlane.xlu0 %571
    %573 = vmax.xlane.f32.xlu0 %v570
    %v574 = vpop.xlane.xlu0 %573
    %vm575 = vcmp.eq.f32.partialorder %v569, %v572
    %vm576 = vcmp.eq.f32.partialorder %v570, %v574
    %v577 = vsel %vm575, %v92, 1073741824
    %v578 = vsel %vm576, %v92, 1073741824
    %v579 = vand.u32 %v577, 65535
    %v580 = vshra.s32 %v577, 16
    %v581 = vcvt.s32.f32 %v579
    %v582 = vcvt.s32.f32 %v580
    %583 = vmin.xlane.f32.xlu0 %v582
    %v584 = vpop.xlane.xlu0 %583
    %vm585 = vcmp.eq.f32.partialorder %v582, %v584
    %v586 = vsel %vm585, %v581, inf
    %587 = vmin.xlane.f32.xlu0 %v586
    %v588 = vpop.xlane.xlu0 %587
    %v589 = vcvt.f32.s32 %v588
    %v590 = vcvt.f32.s32 %v584
    %v591 = vshll.u32 %v590, 16
    %v592 = vadd.s32 %v591, %v589
    %v593 = vand.u32 %v578, 65535
    %v594 = vshra.s32 %v578, 16
    %v595 = vcvt.s32.f32 %v593
    %v596 = vcvt.s32.f32 %v594
    %597 = vmin.xlane.f32.xlu0 %v596
    %v598 = vpop.xlane.xlu0 %597
    %vm599 = vcmp.eq.f32.partialorder %v596, %v598
    %v600 = vsel %vm599, %v595, inf
    %601 = vmin.xlane.f32.xlu0 %v600
    %v602 = vpop.xlane.xlu0 %601
    %v603 = vcvt.f32.s32 %v602
    %v604 = vcvt.f32.s32 %v598
    %v605 = vshll.u32 %v604, 16
    %v606 = vadd.s32 %v605, %v603
    %v607 = vsel %vm136, %v563, inf
    %608 = vmin.xlane.f32.xlu0 %v607
    %v609 = vpop.xlane.xlu0 %608
    %v610 = vsel %vm136, %v564, inf
    %611 = vmin.xlane.f32.xlu0 %v610
    %v612 = vpop.xlane.xlu0 %611
    %vm613 = vcmp.eq.f32.partialorder %v563, %v609
    %vm614 = vcmp.eq.f32.partialorder %v564, %v612
    %v615 = vsel %vm613, %v90, 1073741824
    %v616 = vsel %vm614, %v90, 1073741824
    %v617 = vsel %vm136, %v615, 2147483647
    %v618 = vand.u32 %v617, 65535
    %v619 = vshra.s32 %v617, 16
    %v620 = vcvt.s32.f32 %v618
    %v621 = vcvt.s32.f32 %v619
    %622 = vmin.xlane.f32.xlu0 %v621
    %v623 = vpop.xlane.xlu0 %622
    %vm624 = vcmp.eq.f32.partialorder %v621, %v623
    %v625 = vsel %vm624, %v620, inf
    %626 = vmin.xlane.f32.xlu0 %v625
    %v627 = vpop.xlane.xlu0 %626
    %v628 = vcvt.f32.s32 %v627
    %v629 = vcvt.f32.s32 %v623
    %v630 = vshll.u32 %v629, 16
    %v631 = vadd.s32 %v630, %v628
    %v632 = vsel %vm136, %v616, 2147483647
    %v633 = vand.u32 %v632, 65535
    %v634 = vshra.s32 %v632, 16
    %v635 = vcvt.s32.f32 %v633
    %v636 = vcvt.s32.f32 %v634
    %637 = vmin.xlane.f32.xlu0 %v636
    %v638 = vpop.xlane.xlu0 %637
    %vm639 = vcmp.eq.f32.partialorder %v636, %v638
    %v640 = vsel %vm639, %v635, inf
    %641 = vmin.xlane.f32.xlu0 %v640
    %v642 = vpop.xlane.xlu0 %641
    %v643 = vcvt.f32.s32 %v642
    %v644 = vcvt.f32.s32 %v638
    %v645 = vshll.u32 %v644, 16
    %v646 = vadd.s32 %v645, %v643
    %vm647 = vcmp.gt.f32.partialorder %v572, %v609
    %vm648 = vcmp.gt.f32.partialorder %v574, %v612
    %vm649 = vcmp.eq.s32.totalorder %v90, %v631
    %vm650 = vcmp.eq.s32.totalorder %v90, %v646
    %v651 = vsel %vm647, 1, 0
    %v652 = vsel %vm648, 1, 0
    %vm653 = vcmp.eq.s32.totalorder %v651, 1
    %vm654 = vcmp.eq.s32.totalorder %v652, 1
    %vm655 = vmand %vm649, %vm653
    %vm656 = vmand %vm650, %vm654
    %v657 = vsel %vm655, %v572, %v563
    %v658 = vsel %vm656, %v574, %v564
    %v659 = vsel %vm655, %v592, %v565
    %v660 = vsel %vm656, %v606, %v566
    %vm661 = vcmp.eq.s32.totalorder %v577, %v592
    %vm662 = vcmp.eq.s32.totalorder %v578, %v606
    %v663 = vsel %vm661, -inf, %v569
    %v664 = vsel %vm662, -inf, %v570
    %665 = vmax.xlane.f32.xlu0 %v663
    %v666 = vpop.xlane.xlu0 %665
    %667 = vmax.xlane.f32.xlu0 %v664
    %v668 = vpop.xlane.xlu0 %667
    %vm669 = vcmp.eq.f32.partialorder %v663, %v666
    %vm670 = vcmp.eq.f32.partialorder %v664, %v668
    %v671 = vsel %vm669, %v92, 1073741824
    %v672 = vsel %vm670, %v92, 1073741824
    %v673 = vand.u32 %v671, 65535
    %v674 = vshra.s32 %v671, 16
    %v675 = vcvt.s32.f32 %v673
    %v676 = vcvt.s32.f32 %v674
    %677 = vmin.xlane.f32.xlu0 %v676
    %v678 = vpop.xlane.xlu0 %677
    %vm679 = vcmp.eq.f32.partialorder %v676, %v678
    %v680 = vsel %vm679, %v675, inf
    %681 = vmin.xlane.f32.xlu0 %v680
    %v682 = vpop.xlane.xlu0 %681
    %v683 = vcvt.f32.s32 %v682
    %v684 = vcvt.f32.s32 %v678
    %v685 = vshll.u32 %v684, 16
    %v686 = vadd.s32 %v685, %v683
    %v687 = vand.u32 %v672, 65535
    %v688 = vshra.s32 %v672, 16
    %v689 = vcvt.s32.f32 %v687
    %v690 = vcvt.s32.f32 %v688
    %691 = vmin.xlane.f32.xlu0 %v690
    %v692 = vpop.xlane.xlu0 %691
    %vm693 = vcmp.eq.f32.partialorder %v690, %v692
    %v694 = vsel %vm693, %v689, inf
    %695 = vmin.xlane.f32.xlu0 %v694
    %v696 = vpop.xlane.xlu0 %695
    %v697 = vcvt.f32.s32 %v696
    %v698 = vcvt.f32.s32 %v692
    %v699 = vshll.u32 %v698, 16
    %v700 = vadd.s32 %v699, %v697
    %v701 = vsel %vm136, %v657, inf
    %702 = vmin.xlane.f32.xlu0 %v701
    %v703 = vpop.xlane.xlu0 %702
    %v704 = vsel %vm136, %v658, inf
    %705 = vmin.xlane.f32.xlu0 %v704
    %v706 = vpop.xlane.xlu0 %705
    %vm707 = vcmp.eq.f32.partialorder %v657, %v703
    %vm708 = vcmp.eq.f32.partialorder %v658, %v706
    %v709 = vsel %vm707, %v90, 1073741824
    %v710 = vsel %vm708, %v90, 1073741824
    %v711 = vsel %vm136, %v709, 2147483647
    %v712 = vand.u32 %v711, 65535
    %v713 = vshra.s32 %v711, 16
    %v714 = vcvt.s32.f32 %v712
    %v715 = vcvt.s32.f32 %v713
    %716 = vmin.xlane.f32.xlu0 %v715
    %v717 = vpop.xlane.xlu0 %716
    %vm718 = vcmp.eq.f32.partialorder %v715, %v717
    %v719 = vsel %vm718, %v714, inf
    %720 = vmin.xlane.f32.xlu0 %v719
    %v721 = vpop.xlane.xlu0 %720
    %v722 = vcvt.f32.s32 %v721
    %v723 = vcvt.f32.s32 %v717
    %v724 = vshll.u32 %v723, 16
    %v725 = vadd.s32 %v724, %v722
    %v726 = vsel %vm136, %v710, 2147483647
    %v727 = vand.u32 %v726, 65535
    %v728 = vshra.s32 %v726, 16
    %v729 = vcvt.s32.f32 %v727
    %v730 = vcvt.s32.f32 %v728
    %731 = vmin.xlane.f32.xlu0 %v730
    %v732 = vpop.xlane.xlu0 %731
    %vm733 = vcmp.eq.f32.partialorder %v730, %v732
    %v734 = vsel %vm733, %v729, inf
    %735 = vmin.xlane.f32.xlu0 %v734
    %v736 = vpop.xlane.xlu0 %735
    %v737 = vcvt.f32.s32 %v736
    %v738 = vcvt.f32.s32 %v732
    %v739 = vshll.u32 %v738, 16
    %v740 = vadd.s32 %v739, %v737
    %vm741 = vcmp.gt.f32.partialorder %v666, %v703
    %vm742 = vcmp.gt.f32.partialorder %v668, %v706
    %vm743 = vcmp.eq.s32.totalorder %v90, %v725
    %vm744 = vcmp.eq.s32.totalorder %v90, %v740
    %v745 = vsel %vm741, 1, 0
    %v746 = vsel %vm742, 1, 0
    %vm747 = vcmp.eq.s32.totalorder %v745, 1
    %vm748 = vcmp.eq.s32.totalorder %v746, 1
    %vm749 = vmand %vm743, %vm747
    %vm750 = vmand %vm744, %vm748
    %v751 = vsel %vm749, %v666, %v657
    %v752 = vsel %vm750, %v668, %v658
    %v753 = vsel %vm749, %v686, %v659
    %v754 = vsel %vm750, %v700, %v660
    %vm755 = vcmp.eq.s32.totalorder %v671, %v686
    %vm756 = vcmp.eq.s32.totalorder %v672, %v700
    %v757 = vsel %vm755, -inf, %v663
    %v758 = vsel %vm756, -inf, %v664
    %759 = vmax.xlane.f32.xlu0 %v757
    %v760 = vpop.xlane.xlu0 %759
    %761 = vmax.xlane.f32.xlu0 %v758
    %v762 = vpop.xlane.xlu0 %761
    %vm763 = vcmp.eq.f32.partialorder %v757, %v760
    %vm764 = vcmp.eq.f32.partialorder %v758, %v762
    %v765 = vsel %vm763, %v92, 1073741824
    %v766 = vsel %vm764, %v92, 1073741824
    %v767 = vand.u32 %v765, 65535
    %v768 = vshra.s32 %v765, 16
    %v769 = vcvt.s32.f32 %v767
    %v770 = vcvt.s32.f32 %v768
    %771 = vmin.xlane.f32.xlu0 %v770
    %v772 = vpop.xlane.xlu0 %771
    %vm773 = vcmp.eq.f32.partialorder %v770, %v772
    %v774 = vsel %vm773, %v769, inf
    %775 = vmin.xlane.f32.xlu0 %v774
    %v776 = vpop.xlane.xlu0 %775
    %v777 = vcvt.f32.s32 %v776
    %v778 = vcvt.f32.s32 %v772
    %v779 = vshll.u32 %v778, 16
    %v780 = vadd.s32 %v779, %v777
    %v781 = vand.u32 %v766, 65535
    %v782 = vshra.s32 %v766, 16
    %v783 = vcvt.s32.f32 %v781
    %v784 = vcvt.s32.f32 %v782
    %785 = vmin.xlane.f32.xlu0 %v784
    %v786 = vpop.xlane.xlu0 %785
    %vm787 = vcmp.eq.f32.partialorder %v784, %v786
    %v788 = vsel %vm787, %v783, inf
    %789 = vmin.xlane.f32.xlu0 %v788
    %v790 = vpop.xlane.xlu0 %789
    %v791 = vcvt.f32.s32 %v790
    %v792 = vcvt.f32.s32 %v786
    %v793 = vshll.u32 %v792, 16
    %v794 = vadd.s32 %v793, %v791
    %v795 = vsel %vm136, %v751, inf
    %796 = vmin.xlane.f32.xlu0 %v795
    %v797 = vpop.xlane.xlu0 %796
    %v798 = vsel %vm136, %v752, inf
    %799 = vmin.xlane.f32.xlu0 %v798
    %v800 = vpop.xlane.xlu0 %799
    %vm801 = vcmp.eq.f32.partialorder %v751, %v797
    %vm802 = vcmp.eq.f32.partialorder %v752, %v800
    %v803 = vsel %vm801, %v90, 1073741824
    %v804 = vsel %vm802, %v90, 1073741824
    %v805 = vsel %vm136, %v803, 2147483647
    %v806 = vand.u32 %v805, 65535
    %v807 = vshra.s32 %v805, 16
    %v808 = vcvt.s32.f32 %v806
    %v809 = vcvt.s32.f32 %v807
    %810 = vmin.xlane.f32.xlu0 %v809
    %v811 = vpop.xlane.xlu0 %810
    %vm812 = vcmp.eq.f32.partialorder %v809, %v811
    %v813 = vsel %vm812, %v808, inf
    %814 = vmin.xlane.f32.xlu0 %v813
    %v815 = vpop.xlane.xlu0 %814
    %v816 = vcvt.f32.s32 %v815
    %v817 = vcvt.f32.s32 %v811
    %v818 = vshll.u32 %v817, 16
    %v819 = vadd.s32 %v818, %v816
    %v820 = vsel %vm136, %v804, 2147483647
    %v821 = vand.u32 %v820, 65535
    %v822 = vshra.s32 %v820, 16
    %v823 = vcvt.s32.f32 %v821
    %v824 = vcvt.s32.f32 %v822
    %825 = vmin.xlane.f32.xlu0 %v824
    %v826 = vpop.xlane.xlu0 %825
    %vm827 = vcmp.eq.f32.partialorder %v824, %v826
    %v828 = vsel %vm827, %v823, inf
    %829 = vmin.xlane.f32.xlu0 %v828
    %v830 = vpop.xlane.xlu0 %829
    %v831 = vcvt.f32.s32 %v830
    %v832 = vcvt.f32.s32 %v826
    %v833 = vshll.u32 %v832, 16
    %v834 = vadd.s32 %v833, %v831
    %vm835 = vcmp.gt.f32.partialorder %v760, %v797
    %vm836 = vcmp.gt.f32.partialorder %v762, %v800
    %vm837 = vcmp.eq.s32.totalorder %v90, %v819
    %vm838 = vcmp.eq.s32.totalorder %v90, %v834
    %v839 = vsel %vm835, 1, 0
    %v840 = vsel %vm836, 1, 0
    %vm841 = vcmp.eq.s32.totalorder %v839, 1
    %vm842 = vcmp.eq.s32.totalorder %v840, 1
    %vm843 = vmand %vm837, %vm841
    %vm844 = vmand %vm838, %vm842
    %v845 = vsel %vm843, %v760, %v751
    %v846 = vsel %vm844, %v762, %v752
    %v847 = vsel %vm843, %v780, %v753
    %v848 = vsel %vm844, %v794, %v754
    %849 = vst.msk [vmem:[%s2] sm:$0xff] %vm136, %v845
    %850 = vst.msk [vmem:[%s2 + $0x8] sm:$0xff] %vm136, %v846
    %851 = vst.msk [vmem:[%s3] sm:$0xff] %vm136, %v847
    %852 = vst.msk [vmem:[%s3 + $0x8] sm:$0xff] %vm136, %v848
    // Predicated region
    $region22: #{tpu_custom_call.1} parent=1 // pred_check
      _
    $region23: #{tpu_custom_call.1} parent=1 // pred_check_branch
      %854 = sbr.rel (0) target = $region25
    $region24: #{tpu_custom_call.1} parent=1 // pred_region
      _
    $region25: #{tpu_custom_call.1} parent=1 // pred_fallthru
      _
    // Predicated region
    $region26: #{tpu_custom_call.1} parent=1 // pred_check
      _
    $region27: #{tpu_custom_call.1} parent=1 // pred_check_branch
      %856 = sbr.rel (0) target = $region29
    $region28: #{tpu_custom_call.1} parent=1 // pred_region
      _
    $region29: #{tpu_custom_call.1} parent=1 // pred_fallthru
      _
    // Predicated region
    $region30: #{tpu_custom_call.1} parent=1 // pred_check
      _
    $region31: #{tpu_custom_call.1} parent=1 // pred_check_branch
      %858 = sbr.rel (0) target = $region33
    $region32: #{tpu_custom_call.1} parent=1 // pred_region
      _
    $region33: #{tpu_custom_call.1} parent=1 // pred_fallthru
      _
    // Predicated region
    $region34: #{tpu_custom_call.1} parent=1 // pred_check
      _
    $region35: #{tpu_custom_call.1} parent=1 // pred_check_branch
      %860 = sbr.rel (0) target = $region37
    $region36: #{tpu_custom_call.1} parent=1 // pred_region
      _
    $region37: #{tpu_custom_call.1} parent=1 // pred_fallthru
      _
    %861 = vsyncpa [#allocation3], 1
    %862 = vsyncpa [#allocation5], 1

</llo_original>
